<compile_context>
chip_gen: v6e
topology: v6e:2x2x1
jax: 0.10.0
libtpu: 0.0.40
codegen_flags: <defaults>
</compile_context>

<pallas_src>
import jax
import jax.numpy as jnp
from jax.experimental import pallas as pl
from jax.experimental.pallas import tpu as pltpu

BN_EPS = 1e-5


def _pick_tile_m(hw_padded, cap=4096):
    """Largest multiple-of-128 tile (<= cap) that divides the padded pixel axis."""
    best = 128
    t = 128
    while t <= min(hw_padded, cap):
        if hw_padded % t == 0:
            best = t
        t += 128
    return best


def basic_model_forward(x_nchw, conv_w, conv_b, bn_gamma, bn_beta):
    """x_nchw: [N, Cin, H, W] f32; conv_w: [Cout, Cin, 1, 1]; conv_b/gamma/beta: [Cout].

    conv_b is accepted for interface parity but is mathematically a no-op under
    training-mode BatchNorm (it cancels before normalization), so it is unused.
    """
    del conv_b  # exact cancellation under batch-stat BN (see module docstring)

    N, Cin, H, W = x_nchw.shape
    Cout = conv_w.shape[0]
    HW = H * W
    M = N * HW  # true pixel count for the BN statistics

    w = conv_w.reshape(Cout, Cin).astype(jnp.float32)

    # NCHW -> (N, C, H*W): pure reshape, contiguous minor axis untouched.
    x3 = x_nchw.reshape(N, Cin, HW).astype(jnp.float32)

    # Pad the pixel (lane) axis to a multiple of 128. Padded pixels are zero and
    # the in-kernel conv has no bias, so they add exactly 0 to sum / sum-of-squares.
    pad = (-HW) % 128
    if pad:
        x3 = jnp.pad(x3, ((0, 0), (0, 0), (0, pad)))
    HWp = HW + pad

    TM = _pick_tile_m(HWp)
    n_m = HWp // TM
    n_chunks = TM // 128
    grid = (N, n_m)

    # ------------------------------------------------------------------
    # Pass 1: per-channel sum / sum-of-squares of the (bias-free) conv output,
    # accumulated as lane-partials in a (2*Cout, 128) VMEM accumulator.
    # ------------------------------------------------------------------
    def stats_kernel(w_ref, x_ref, acc_ref):
        # w_ref:   SMEM (Cout, Cin) scalars
        # x_ref:   VMEM (1, Cin, TM)  -- pixels on lanes
        # acc_ref: VMEM (2*Cout, 128) accumulator, resident across the grid
        @pl.when(jnp.logical_and(pl.program_id(0) == 0, pl.program_id(1) == 0))
        def _init():
            acc_ref[...] = jnp.zeros_like(acc_ref)

        x = x_ref[0]  # (Cin, TM)
        sums, sqs = [], []
        for c in range(Cout):
            # 1x1 conv for output channel c: pure VPU broadcast FMAs (no MXU).
            yc = w_ref[c, 0] * x[0:1, :]
            for k in range(1, Cin):
                yc = yc + w_ref[c, k] * x[k:k + 1, :]
            s = jnp.zeros((1, 128), jnp.float32)
            q = jnp.zeros((1, 128), jnp.float32)
            for j in range(n_chunks):  # lane-partial reduction, VPU adds only
                ch = yc[:, j * 128:(j + 1) * 128]
                s = s + ch
                q = q + ch * ch
            sums.append(s)
            sqs.append(q)
        acc_ref[...] += jnp.concatenate(sums + sqs, axis=0)  # (2*Cout, 128)

    acc = pl.pallas_call(
        stats_kernel,
        out_shape=jax.ShapeDtypeStruct((2 * Cout, 128), jnp.float32),
        grid=grid,
        in_specs=[
            pl.BlockSpec(memory_space=pltpu.MemorySpace.SMEM),       # w (Cout, Cin)
            pl.BlockSpec((1, Cin, TM), lambda n, m: (n, 0, m)),      # x tile
        ],
        out_specs=pl.BlockSpec((2 * Cout, 128), lambda n, m: (0, 0)),
        compiler_params=pltpu.CompilerParams(
            dimension_semantics=("arbitrary", "arbitrary")),
    )(w, x3)

    # Tiny per-channel math (6 scalars) outside the kernel: fold BN into the conv.
    sum_c = jnp.sum(acc[:Cout], axis=1)               # (Cout,)
    sumsq_c = jnp.sum(acc[Cout:2 * Cout], axis=1)     # (Cout,)
    mean = sum_c / M                                  # bias-free mean (bias cancels)
    var = jnp.maximum(sumsq_c / M - mean * mean, 0.0)  # biased variance
    inv_std = 1.0 / jnp.sqrt(var + BN_EPS)
    scale = bn_gamma.astype(jnp.float32) * inv_std
    shift = bn_beta.astype(jnp.float32) - mean * scale
    w_fold = scale[:, None] * w                       # BN scale folded into conv weight

    # ------------------------------------------------------------------
    # Pass 2: out = relu(W_fold @ x + shift), fully parallel over (N, M-tiles).
    # ------------------------------------------------------------------
    def apply_kernel(wf_ref, shift_ref, x_ref, o_ref):
        # wf_ref:    SMEM (Cout, Cin)
        # shift_ref: SMEM (Cout,)
        # x_ref:     VMEM (1, Cin, TM)
        # o_ref:     VMEM (1, Cout, TM) -- lane-dense output tile
        x = x_ref[0]  # (Cin, TM)
        rows = []
        for c in range(Cout):
            yc = wf_ref[c, 0] * x[0:1, :]
            for k in range(1, Cin):
                yc = yc + wf_ref[c, k] * x[k:k + 1, :]
            yc = yc + shift_ref[c]
            rows.append(jnp.maximum(yc, 0.0))
        o_ref[0] = jnp.concatenate(rows, axis=0)  # (Cout, TM)

    out3 = pl.pallas_call(
        apply_kernel,
        out_shape=jax.ShapeDtypeStruct((N, Cout, HWp), jnp.float32),
        grid=grid,
        in_specs=[
            pl.BlockSpec(memory_space=pltpu.MemorySpace.SMEM),       # folded weight
            pl.BlockSpec(memory_space=pltpu.MemorySpace.SMEM),       # shift
            pl.BlockSpec((1, Cin, TM), lambda n, m: (n, 0, m)),      # x tile
        ],
        out_specs=pl.BlockSpec((1, Cout, TM), lambda n, m: (n, 0, m)),
        compiler_params=pltpu.CompilerParams(
            dimension_semantics=("parallel", "parallel")),
    )(w_fold, shift, x3)

    if pad:
        out3 = out3[:, :, :HW]
    return out3.reshape(N, Cout, H, W)


def reference_forward(x_nchw, conv_w, conv_b, bn_gamma, bn_beta):
    """Pure-JAX reference matching PyTorch training-mode semantics (with bias)."""
    N, Cin, H, W = x_nchw.shape
    Cout = conv_w.shape[0]
    w2d = conv_w.reshape(Cout, Cin)
    y = jnp.einsum("nchw,oc->nohw", x_nchw, w2d) + conv_b.reshape(1, Cout, 1, 1)
    mean = jnp.mean(y, axis=(0, 2, 3), keepdims=True)
    var = jnp.mean((y - mean) ** 2, axis=(0, 2, 3), keepdims=True)
    y = (y - mean) / jnp.sqrt(var + BN_EPS)
    y = y * bn_gamma.reshape(1, Cout, 1, 1) + bn_beta.reshape(1, Cout, 1, 1)
    return jnp.maximum(y, 0.0)


if __name__ == "__main__":
    key = jax.random.PRNGKey(0)
    k_x, k_w, k_b = jax.random.split(key, 3)

    N, Cin, Cout, H, W = 2, 3, 3, 16, 16

    x = jax.random.normal(k_x, (N, Cin, H, W), dtype=jnp.float32)

    # Deterministic parameter init (Kaiming-uniform-like scale for the 1x1 conv).
    fan_in = Cin * 1 * 1
    bound = 1.0 / (fan_in ** 0.5)
    conv_w = jax.random.uniform(k_w, (Cout, Cin, 1, 1), jnp.float32, -bound, bound)
    conv_b = jax.random.uniform(k_b, (Cout,), jnp.float32, -bound, bound)
    bn_gamma = jnp.ones((Cout,), jnp.float32)   # BatchNorm2d default affine init
    bn_beta = jnp.zeros((Cout,), jnp.float32)

    out = basic_model_forward(x, conv_w, conv_b, bn_gamma, bn_beta)
    out = jax.block_until_ready(out)

    ref = reference_forward(x, conv_w, conv_b, bn_gamma, bn_beta)
    assert out.shape == (N, Cout, H, W)
    assert jnp.allclose(out, ref, atol=1e-4, rtol=1e-4), "mismatch vs reference"

    print("KERNEL_OK")
</pallas_src>

<mosaic_0001>
module attributes {stable_mosaic.version = 11 : i64} {
  func.func @stats_kernel(%arg0: i32, %arg1: i32, %arg2: memref<3x3xf32, #tpu.memory_space<smem>>, %arg3: memref<1x3x256xf32, #tpu.memory_space<vmem>>, %arg4: memref<6x128xf32, #tpu.memory_space<vmem>>) attributes {dimension_semantics = [#tpu.dimension_semantics<arbitrary>, #tpu.dimension_semantics<arbitrary>], iteration_bounds = array<i64: 2, 1>, scalar_prefetch = 0 : i64, scratch_operands = 0 : i64, tpu.core_type = #tpu.core_type<tc>, window_params = [{transform_indices = @transform_0, window_bounds = array<i64: 3, 3>}, {transform_indices = @transform_1, window_bounds = array<i64: 1, 3, 256>}, {pipeline_mode = #tpu.pipeline_mode<synchronous>, transform_indices = @transform_2, window_bounds = array<i64: 6, 128>}]} {
    %c0_i32 = arith.constant 0 : i32
    %0 = arith.cmpi eq, %arg0, %c0_i32 : i32
    %c0_i32_0 = arith.constant 0 : i32
    %1 = arith.cmpi eq, %arg1, %c0_i32_0 : i32
    %2 = arith.andi %0, %1 : i1
    %3 = arith.extui %2 : i1 to i32
    %c0_i32_1 = arith.constant 0 : i32
    %4 = arith.cmpi ne, %3, %c0_i32_1 : i32
    scf.if %4 {
      %cst_29 = arith.constant 0.000000e+00 : f32
      %83 = vector.broadcast %cst_29 : f32 to vector<6x128xf32>
      %c0_30 = arith.constant 0 : index
      %c0_31 = arith.constant 0 : index
      %84 = vector.load %arg4[%c0_30, %c0_31] : memref<6x128xf32, #tpu.memory_space<vmem>>, vector<6x128xf32>
      tpu.vector_store %arg4[%c0_30, %c0_31], %83 {strides = array<i32>} : memref<6x128xf32, #tpu.memory_space<vmem>>, vector<6x128xf32>,
    } else {
    }
    %c0 = arith.constant 0 : index
    %c0_2 = arith.constant 0 : index
    %c0_3 = arith.constant 0 : index
    %5 = vector.load %arg3[%c0, %c0_2, %c0_3] : memref<1x3x256xf32, #tpu.memory_space<vmem>>, vector<1x3x256xf32>
    %6 = vector.shape_cast %5 : vector<1x3x256xf32> to vector<3x256xf32>
    %c0_4 = arith.constant 0 : index
    %c0_5 = arith.constant 0 : index
    %7 = memref.load %arg2[%c0_4, %c0_5] : memref<3x3xf32, #tpu.memory_space<smem>>
    %8 = vector.extract_strided_slice %6 {offsets = [0, 0], sizes = [1, 256], strides = [1, 1]} : vector<3x256xf32> to vector<1x256xf32>
    %9 = vector.broadcast %7 : f32 to vector<1x256xf32>
    %10 = arith.mulf %9, %8 : vector<1x256xf32>
    %c0_6 = arith.constant 0 : index
    %c1 = arith.constant 1 : index
    %11 = memref.load %arg2[%c0_6, %c1] : memref<3x3xf32, #tpu.memory_space<smem>>
    %12 = vector.extract_strided_slice %6 {offsets = [1, 0], sizes = [1, 256], strides = [1, 1]} : vector<3x256xf32> to vector<1x256xf32>
    %13 = vector.broadcast %11 : f32 to vector<1x256xf32>
    %14 = arith.mulf %13, %12 : vector<1x256xf32>
    %15 = arith.addf %10, %14 : vector<1x256xf32>
    %c0_7 = arith.constant 0 : index
    %c2 = arith.constant 2 : index
    %16 = memref.load %arg2[%c0_7, %c2] : memref<3x3xf32, #tpu.memory_space<smem>>
    %17 = vector.extract_strided_slice %6 {offsets = [2, 0], sizes = [1, 256], strides = [1, 1]} : vector<3x256xf32> to vector<1x256xf32>
    %18 = vector.broadcast %16 : f32 to vector<1x256xf32>
    %19 = arith.mulf %18, %17 : vector<1x256xf32>
    %20 = arith.addf %15, %19 : vector<1x256xf32>
    %cst = arith.constant 0.000000e+00 : f32
    %21 = vector.broadcast %cst : f32 to vector<1x128xf32>
    %cst_8 = arith.constant 0.000000e+00 : f32
    %22 = vector.broadcast %cst_8 : f32 to vector<1x128xf32>
    %23 = vector.extract_strided_slice %20 {offsets = [0, 0], sizes = [1, 128], strides = [1, 1]} : vector<1x256xf32> to vector<1x128xf32>
    %24 = arith.addf %21, %23 : vector<1x128xf32>
    %25 = arith.mulf %23, %23 : vector<1x128xf32>
    %26 = arith.addf %22, %25 : vector<1x128xf32>
    %27 = vector.extract_strided_slice %20 {offsets = [0, 128], sizes = [1, 128], strides = [1, 1]} : vector<1x256xf32> to vector<1x128xf32>
    %28 = arith.addf %24, %27 : vector<1x128xf32>
    %29 = arith.mulf %27, %27 : vector<1x128xf32>
    %30 = arith.addf %26, %29 : vector<1x128xf32>
    %c1_9 = arith.constant 1 : index
    %c0_10 = arith.constant 0 : index
    %31 = memref.load %arg2[%c1_9, %c0_10] : memref<3x3xf32, #tpu.memory_space<smem>>
    %32 = vector.extract_strided_slice %6 {offsets = [0, 0], sizes = [1, 256], strides = [1, 1]} : vector<3x256xf32> to vector<1x256xf32>
    %33 = vector.broadcast %31 : f32 to vector<1x256xf32>
    %34 = arith.mulf %33, %32 : vector<1x256xf32>
    %c1_11 = arith.constant 1 : index
    %c1_12 = arith.constant 1 : index
    %35 = memref.load %arg2[%c1_11, %c1_12] : memref<3x3xf32, #tpu.memory_space<smem>>
    %36 = vector.extract_strided_slice %6 {offsets = [1, 0], sizes = [1, 256], strides = [1, 1]} : vector<3x256xf32> to vector<1x256xf32>
    %37 = vector.broadcast %35 : f32 to vector<1x256xf32>
    %38 = arith.mulf %37, %36 : vector<1x256xf32>
    %39 = arith.addf %34, %38 : vector<1x256xf32>
    %c1_13 = arith.constant 1 : index
    %c2_14 = arith.constant 2 : index
    %40 = memref.load %arg2[%c1_13, %c2_14] : memref<3x3xf32, #tpu.memory_space<smem>>
    %41 = vector.extract_strided_slice %6 {offsets = [2, 0], sizes = [1, 256], strides = [1, 1]} : vector<3x256xf32> to vector<1x256xf32>
    %42 = vector.broadcast %40 : f32 to vector<1x256xf32>
    %43 = arith.mulf %42, %41 : vector<1x256xf32>
    %44 = arith.addf %39, %43 : vector<1x256xf32>
    %cst_15 = arith.constant 0.000000e+00 : f32
    %45 = vector.broadcast %cst_15 : f32 to vector<1x128xf32>
    %cst_16 = arith.constant 0.000000e+00 : f32
    %46 = vector.broadcast %cst_16 : f32 to vector<1x128xf32>
    %47 = vector.extract_strided_slice %44 {offsets = [0, 0], sizes = [1, 128], strides = [1, 1]} : vector<1x256xf32> to vector<1x128xf32>
    %48 = arith.addf %45, %47 : vector<1x128xf32>
    %49 = arith.mulf %47, %47 : vector<1x128xf32>
    %50 = arith.addf %46, %49 : vector<1x128xf32>
    %51 = vector.extract_strided_slice %44 {offsets = [0, 128], sizes = [1, 128], strides = [1, 1]} : vector<1x256xf32> to vector<1x128xf32>
    %52 = arith.addf %48, %51 : vector<1x128xf32>
    %53 = arith.mulf %51, %51 : vector<1x128xf32>
    %54 = arith.addf %50, %53 : vector<1x128xf32>
    %c2_17 = arith.constant 2 : index
    %c0_18 = arith.constant 0 : index
    %55 = memref.load %arg2[%c2_17, %c0_18] : memref<3x3xf32, #tpu.memory_space<smem>>
    %56 = vector.extract_strided_slice %6 {offsets = [0, 0], sizes = [1, 256], strides = [1, 1]} : vector<3x256xf32> to vector<1x256xf32>
    %57 = vector.broadcast %55 : f32 to vector<1x256xf32>
    %58 = arith.mulf %57, %56 : vector<1x256xf32>
    %c2_19 = arith.constant 2 : index
    %c1_20 = arith.constant 1 : index
    %59 = memref.load %arg2[%c2_19, %c1_20] : memref<3x3xf32, #tpu.memory_space<smem>>
    %60 = vector.extract_strided_slice %6 {offsets = [1, 0], sizes = [1, 256], strides = [1, 1]} : vector<3x256xf32> to vector<1x256xf32>
    %61 = vector.broadcast %59 : f32 to vector<1x256xf32>
    %62 = arith.mulf %61, %60 : vector<1x256xf32>
    %63 = arith.addf %58, %62 : vector<1x256xf32>
    %c2_21 = arith.constant 2 : index
    %c2_22 = arith.constant 2 : index
    %64 = memref.load %arg2[%c2_21, %c2_22] : memref<3x3xf32, #tpu.memory_space<smem>>
    %65 = vector.extract_strided_slice %6 {offsets = [2, 0], sizes = [1, 256], strides = [1, 1]} : vector<3x256xf32> to vector<1x256xf32>
    %66 = vector.broadcast %64 : f32 to vector<1x256xf32>
    %67 = arith.mulf %66, %65 : vector<1x256xf32>
    %68 = arith.addf %63, %67 : vector<1x256xf32>
    %cst_23 = arith.constant 0.000000e+00 : f32
    %69 = vector.broadcast %cst_23 : f32 to vector<1x128xf32>
    %cst_24 = arith.constant 0.000000e+00 : f32
    %70 = vector.broadcast %cst_24 : f32 to vector<1x128xf32>
    %71 = vector.extract_strided_slice %68 {offsets = [0, 0], sizes = [1, 128], strides = [1, 1]} : vector<1x256xf32> to vector<1x128xf32>
    %72 = arith.addf %69, %71 : vector<1x128xf32>
    %73 = arith.mulf %71, %71 : vector<1x128xf32>
    %74 = arith.addf %70, %73 : vector<1x128xf32>
    %75 = vector.extract_strided_slice %68 {offsets = [0, 128], sizes = [1, 128], strides = [1, 1]} : vector<1x256xf32> to vector<1x128xf32>
    %76 = arith.addf %72, %75 : vector<1x128xf32>
    %77 = arith.mulf %75, %75 : vector<1x128xf32>
    %78 = arith.addf %74, %77 : vector<1x128xf32>
    %c0_25 = arith.constant 0 : index
    %c0_26 = arith.constant 0 : index
    %79 = vector.load %arg4[%c0_25, %c0_26] : memref<6x128xf32, #tpu.memory_space<vmem>>, vector<6x128xf32>
    %80 = tpu.concatenate %28, %52, %76, %30, %54, %78 in 0 : vector<1x128xf32>, vector<1x128xf32>, vector<1x128xf32>, vector<1x128xf32>, vector<1x128xf32>, vector<1x128xf32> -> vector<6x128xf32>
    %81 = arith.addf %79, %80 : vector<6x128xf32>
    %c0_27 = arith.constant 0 : index
    %c0_28 = arith.constant 0 : index
    %82 = vector.load %arg4[%c0_27, %c0_28] : memref<6x128xf32, #tpu.memory_space<vmem>>, vector<6x128xf32>
    tpu.vector_store %arg4[%c0_27, %c0_28], %81 {strides = array<i32>} : memref<6x128xf32, #tpu.memory_space<vmem>>, vector<6x128xf32>,
    return
  }
  func.func @transform_0(%arg0: i32, %arg1: i32) -> (i32, i32) {
    %c0_i32 = arith.constant 0 : i32
    %c0_i32_0 = arith.constant 0 : i32
    %c0_i32_1 = arith.constant 0 : i32
    return %c0_i32, %c0_i32_0 : i32, i32
  }
  func.func @transform_1(%arg0: i32, %arg1: i32) -> (i32, i32, i32) {
    %c0_i32 = arith.constant 0 : i32
    %c0_i32_0 = arith.constant 0 : i32
    return %arg0, %c0_i32, %arg1 : i32, i32, i32
  }
  func.func @transform_2(%arg0: i32, %arg1: i32) -> (i32, i32) {
    %c0_i32 = arith.constant 0 : i32
    %c0_i32_0 = arith.constant 0 : i32
    %c0_i32_1 = arith.constant 0 : i32
    return %c0_i32, %c0_i32_0 : i32, i32
  }
}

</mosaic_0001>

<llo_original>
// kernel: tpu_custom_call.1
$region0: #{tpu_custom_call.1}
  #allocation0 [shape = 'u32[]', space=smem, size = 0x4, offset = 0x4, fixed_abs, tag = 'smem constant byte address 0x4 - core index']
  #allocation1 [shape = 'u32[144,128]{1,0:T(1,128)}', space=vmem, size = 0x12000, scoped, tag = 'internal scratch']
  %s0 = inlined_call_operand.vmem [shape: f32[3,3], index: 0, kind: input, shape index: {}]
  %s1 = inlined_call_operand.vmem [shape: f32[2,3,256], index: 1, kind: input, shape index: {}]
  %s2 = inlined_call_operand.hbm [shape: f32[6,128], index: 2, kind: output, shape index: {}]
  %s3 = sld [smem:[#allocation0]]
  $region49: #{tpu_custom_call.1} parent=0
    _
  %s5 = ssub.s32 1, %s3
  %s6 = scalar_select 0, %s5, %s3
  $region1: #{tpu_custom_call.1} parent=0
    #allocation2 [shape = 'u8[2048]{0}', space=smem, size = 0x800, scoped, tag = 'input window, operand 0, single buffered']
    #allocation3 [shape = 's32[2]{0}', space=sflag, size = 0x8, scoped, tag = 'scoped memory for tpu_custom_call.1']
    #allocation4 [shape = 's32[2]{0}', space=sflag, size = 0x8, scoped, tag = 'scoped memory for tpu_custom_call.1']
    #allocation5 [shape = 'u8[4096]{0}', space=vmem, size = 0x1000, scoped, tag = 'output window, operand 0, single buffered']
    %7 = vsyncpa [#allocation4], 0
    %8 = vsyncpa [#allocation3], 0
    loop: start=0, step=1, limit=4
    $region2: #{tpu_custom_call.1} parent=1 // loop_pre_header
      _
    $region3: #{tpu_custom_call.1} parent=1 // loop_header
      %s10 = sphi 0, %s14
      %p11 = scmp.ge.s32.totalorder %s10, 4
      %s17 = sphi 0, %s29
      %s18 = sphi 0, %s25
      %s19 = sphi 0, %s17
      %s20 = sphi 0, %s18
      %s21 = sphi 0, %s19
      %s22 = sphi 0, %s20
      %s30 = sphi 0, %s30
      %s32 = sphi 0, %s30
      %s33 = sphi 0, %s32
      %s47 = sphi 0, %s33
      %s55 = sphi 0, %s57
      %s58 = sphi 0, %s55
      %s59 = sphi 0, %s58
      %s75 = sphi 0, %s59
      %s79 = sphi 0, %s79
      %s81 = sphi 0, %s79
      %s82 = sphi 0, %s81
      %s96 = sphi 0, %s82
    $region4: #{tpu_custom_call.1} parent=1 // loop_header_branch
      %13 = sbr.rel (%p11) target = $region8
    $region5: #{tpu_custom_call.1} parent=1 // loop_body
      %s15 = ssub.s32 %s10, 1
      %s16 = ssub.s32 %s10, 2
      %s23 = sadd.s32 1, %s18
      %p24 = scmp.ge.s32.totalorder %s23, 1
      %s25 = scalar_select %p24, 0, %s23
      %s26 = sadd.s32 1, %s17
      %s27 = scalar_select %p24, %s26, %s17
      %p28 = scmp.ge.s32.totalorder %s27, 2
      %s29 = scalar_select %p28, 0, %s27
      %s31 = sadd.s32 %s30, 1
      %p34 = scmp.eq.s32.totalorder %s10, 1
      %p35 = scmp.ne.s32.totalorder %s30, %s32
      %p36 = scmp.eq.s32.totalorder %s10, 0
      %p37 = por %p35, %p36
      %p38 = scmp.ne.s32.totalorder %s30, %s32
      %p39 = scmp.eq.s32.totalorder %s15, 1
      %p40 = por %p38, %p39
      %p41 = scmp.ne.s32.totalorder %s32, %s33
      %p42 = scmp.eq.s32.totalorder %s15, 0
      %p43 = por %p41, %p42
      %p44 = scmp.ne.s32.totalorder %s32, %s33
      %p45 = scmp.eq.s32.totalorder %s16, 1
      %p46 = por %p44, %p45
      %p48 = scmp.ne.s32.totalorder %s33, %s47
      %p49 = scmp.eq.s32.totalorder %s16, 0
      %p50 = por %p48, %p49
      %s51 = ssub.s32 %s17, %s29
      %s52 = ssub.s32 %s18, %s25
      %s53 = sor.u32 %s51, %s52
      %p54 = scmp.eq.s32.totalorder %s53, 0
      %s56 = sadd.s32 %s55, 1
      %s57 = scalar_select %p54, %s55, %s56
      %p60 = pneg %p54
      %p61 = scmp.eq.s32.totalorder %s10, 1
      %p62 = por %p60, %p61
      %p63 = scmp.ne.s32.totalorder %s55, %s58
      %p64 = scmp.eq.s32.totalorder %s10, 0
      %p65 = por %p63, %p64
      %p66 = scmp.ne.s32.totalorder %s55, %s58
      %p67 = scmp.eq.s32.totalorder %s15, 1
      %p68 = por %p66, %p67
      %p69 = scmp.ne.s32.totalorder %s58, %s59
      %p70 = scmp.eq.s32.totalorder %s15, 0
      %p71 = por %p69, %p70
      %p72 = scmp.ne.s32.totalorder %s58, %s59
      %p73 = scmp.eq.s32.totalorder %s16, 1
      %p74 = por %p72, %p73
      %p76 = scmp.ne.s32.totalorder %s59, %s75
      %p77 = scmp.eq.s32.totalorder %s16, 0
      %p78 = por %p76, %p77
      %s80 = sadd.s32 %s79, 1
      %p83 = scmp.eq.s32.totalorder %s10, 1
      %p84 = scmp.ne.s32.totalorder %s79, %s81
      %p85 = scmp.eq.s32.totalorder %s10, 0
      %p86 = por %p84, %p85
      %p87 = scmp.ne.s32.totalorder %s79, %s81
      %p88 = scmp.eq.s32.totalorder %s15, 1
      %p89 = por %p87, %p88
      %p90 = scmp.ne.s32.totalorder %s81, %s82
      %p91 = scmp.eq.s32.totalorder %s15, 0
      %p92 = por %p90, %p91
      %p93 = scmp.ne.s32.totalorder %s81, %s82
      %p94 = scmp.eq.s32.totalorder %s16, 1
      %p95 = por %p93, %p94
      %p97 = scmp.ne.s32.totalorder %s82, %s96
      %p98 = scmp.eq.s32.totalorder %s16, 0
      %p99 = por %p97, %p98
      %p100 = scmp.le.s32.totalorder 1, %s10
      %p101 = scmp.lt.s32.totalorder %s10, 3
      %p102 = pnand %p100, %p101
      %p103 = pneg %p102
      // Predicated region
      $region9: #{tpu_custom_call.1} parent=5 // pred_check
        _
      $region10: #{tpu_custom_call.1} parent=5 // pred_check_branch
        %105 = sbr.rel (%p102) target = $region12
      $region11: #{tpu_custom_call.1} parent=5 // pred_region
        %s106 = ssub.s32 %s10, 1
        // Predicated region
        $region13: #{tpu_custom_call.1} parent=11 // pred_check
          %p107 = pneg %p43
        $region14: #{tpu_custom_call.1} parent=11 // pred_check_branch
          %109 = sbr.rel (%p107) target = $region16
        $region15: #{tpu_custom_call.1} parent=11 // pred_region
          %s111 = ssub.s32 64, 64
          %112 = vsyncadd [#allocation4], %s111
          %s114 = sshll.u32 %s0, 4
          %s115 = int_to_ptr.vmem [resolvable:$true] %s114
          %117 = dma.vmem_to_smem %s115, 64, [#allocation2], [#allocation4]
        $region16: #{tpu_custom_call.1} parent=11 // pred_fallthru
          _
      $region12: #{tpu_custom_call.1} parent=5 // pred_fallthru
        _
      %p118 = scmp.lt.s32.totalorder %s10, 2
      // Predicated region
      $region17: #{tpu_custom_call.1} parent=5 // pred_check
        %p119 = pneg %p118
      $region18: #{tpu_custom_call.1} parent=5 // pred_check_branch
        %121 = sbr.rel (%p119) target = $region20
      $region19: #{tpu_custom_call.1} parent=5 // pred_region
        // Predicated region
        $region21: #{tpu_custom_call.1} parent=19 // pred_check
          %p122 = pneg %p65
        $region22: #{tpu_custom_call.1} parent=19 // pred_check_branch
          %124 = sbr.rel (%p122) target = $region24
        $region23: #{tpu_custom_call.1} parent=19 // pred_region
          %s125 = smul.u32 2, %s18
          %p126 = scmp.lt.s32.totalorder %s17, 1
          %s127 = scalar_select %p126, %s17, 1
          %p128 = scmp.lt.s32.totalorder %s125, 1
          %s129 = scalar_select %p128, %s125, 1
          %s130 = smul.addr %s127, 2
          %s131 = sadd.s32 %s129, %s130
          %s132 = smul.addr %s131, 4
          %s133 = scalar_lea.vmem %s1, %s132
          %s134 = smul.u32 2, %s18
        $region24: #{tpu_custom_call.1} parent=19 // pred_fallthru
          _
      $region20: #{tpu_custom_call.1} parent=5 // pred_fallthru
        _
      %p135 = scmp.le.s32.totalorder 1, %s10
      %p136 = scmp.lt.s32.totalorder %s10, 3
      %p137 = pnand %p135, %p136
      %p138 = pneg %p137
      // Predicated region
      $region25: #{tpu_custom_call.1} parent=5 // pred_check
        _
      $region26: #{tpu_custom_call.1} parent=5 // pred_check_branch
        %140 = sbr.rel (%p137) target = $region28
      $region27: #{tpu_custom_call.1} parent=5 // pred_region
        %s141 = ssub.s32 %s10, 1
        // Predicated region
        $region29: #{tpu_custom_call.1} parent=27 // pred_check
          %p142 = pneg %p43
        $region30: #{tpu_custom_call.1} parent=27 // pred_check_branch
          %144 = sbr.rel (%p142) target = $region32
        $region31: #{tpu_custom_call.1} parent=27 // pred_region
          %145 = dma.done [#allocation4], 64
        $region32: #{tpu_custom_call.1} parent=27 // pred_fallthru
          _
        %146 = sfence
        %p147 = pneg %p43
        %p148 = pneg %p40
        %s149 = smul.u32 2, %s20
        %p150 = scmp.lt.s32.totalorder %s19, 1
        %s151 = scalar_select %p150, %s19, 1
        %p152 = scmp.lt.s32.totalorder %s149, 1
        %s153 = scalar_select %p152, %s149, 1
        %s154 = smul.addr %s151, 2
        %s155 = sadd.s32 %s153, %s154
        %s156 = smul.addr %s155, 4
        %s157 = scalar_lea.vmem %s1, %s156
        %p158 = pneg %p71
        %p159 = pneg %p68
        %p160 = pneg %p92
        %p161 = pneg %p89
        %s162 = smul.u32 2, %s20
        %p163 = scmp.lt.s32.totalorder %s19, 1
        %s164 = scalar_select %p163, %s19, 1
        %p165 = scmp.lt.s32.totalorder %s162, 1
        %s166 = scalar_select %p165, %s162, 1
        %s167 = smul.addr %s164, 2
        %s168 = sadd.s32 %s166, %s167
        %s169 = smul.addr %s168, 4
        %s170 = scalar_lea.vmem %s1, %s169
        %s171 = smul.u32 2, %s20
        %p172 = scmp.eq.s32.totalorder %s19, 0
        %p173 = scmp.eq.s32.totalorder %s20, 0
        %p174 = pnand %p172, %p173
        %p175 = pneg %p174
        // Predicated region
        $region33: #{tpu_custom_call.1} parent=27 // pred_check
          _
        $region34: #{tpu_custom_call.1} parent=27 // pred_check_branch
          %177 = sbr.rel (%p174) target = $region36
        $region35: #{tpu_custom_call.1} parent=27 // pred_region
          %178 = vst [vmem:[#allocation5] sm:$0x3f] 0.0
        $region36: #{tpu_custom_call.1} parent=27 // pred_fallthru
          _
        %v179 = vld [vmem:[%s170] sm:$0x77]
        %s180 = sld [smem:[#allocation2]]
        %v181 = vstv %s180
        %v182 = vmul.f32 %v181, %v179
        %s183 = sld [smem:[#allocation2 + $0x1]]
        %v184 = vstv %s183
        %v185 = vmul.f32 %v184, %v179
        %v187 = vrot.slane %v185, 5
        %v188 = vrot.slane %v187, 4
        %v190 = vadd.f32 %v182, %v188
        %s191 = sld [smem:[#allocation2 + $0x2]]
        %v192 = vstv %s191
        %v193 = vmul.f32 %v192, %v179
        %v195 = vrot.slane %v193, 6
        %v196 = vrot.slane %v195, 4
        %v198 = vadd.f32 %v190, %v196
        %v199 = vadd.f32 %v198, 0.0
        %v200 = vmul.f32 %v198, %v198
        %v201 = vadd.f32 %v200, 0.0
        %v203 = vrot.slane %v198, 4
        %v205 = vadd.f32 %v199, %v203
        %v206 = vmul.f32 %v203, %v203
        %v207 = vadd.f32 %v201, %v206
        %s208 = sld [smem:[#allocation2 + $0x80]]
        %v209 = vstv %s208
        %v210 = vmul.f32 %v209, %v179
        %s211 = sld [smem:[#allocation2 + $0x81]]
        %v212 = vstv %s211
        %v213 = vmul.f32 %v212, %v179
        %v215 = vrot.slane %v213, 5
        %v216 = vrot.slane %v215, 4
        %v218 = vadd.f32 %v210, %v216
        %s219 = sld [smem:[#allocation2 + $0x82]]
        %v220 = vstv %s219
        %v221 = vmul.f32 %v220, %v179
        %v223 = vrot.slane %v221, 6
        %v224 = vrot.slane %v223, 4
        %v226 = vadd.f32 %v218, %v224
        %v227 = vadd.f32 %v226, 0.0
        %v228 = vmul.f32 %v226, %v226
        %v229 = vadd.f32 %v228, 0.0
        %v231 = vrot.slane %v226, 4
        %v233 = vadd.f32 %v227, %v231
        %v234 = vmul.f32 %v231, %v231
        %v235 = vadd.f32 %v229, %v234
        %s236 = sld [smem:[#allocation2 + $0x100]]
        %v237 = vstv %s236
        %v238 = vmul.f32 %v237, %v179
        %s239 = sld [smem:[#allocation2 + $0x101]]
        %v240 = vstv %s239
        %v241 = vmul.f32 %v240, %v179
        %v243 = vrot.slane %v241, 5
        %v244 = vrot.slane %v243, 4
        %v246 = vadd.f32 %v238, %v244
        %s247 = sld [smem:[#allocation2 + $0x102]]
        %v248 = vstv %s247
        %v249 = vmul.f32 %v248, %v179
        %v251 = vrot.slane %v249, 6
        %v252 = vrot.slane %v251, 4
        %v254 = vadd.f32 %v246, %v252
        %v255 = vadd.f32 %v254, 0.0
        %v256 = vmul.f32 %v254, %v254
        %v257 = vadd.f32 %v256, 0.0
        %v259 = vrot.slane %v254, 4
        %v261 = vadd.f32 %v255, %v259
        %v262 = vmul.f32 %v259, %v259
        %v263 = vadd.f32 %v257, %v262
        %v264 = vld [vmem:[#allocation5] sm:$0x3f]
        %v266 = vlaneseq
        %v267 = vshrl.u32 %v266, 7
        %v268 = vsub.s32 0, %v267
        %v269 = vrot.slane %v233, %v268
        %v272 = vlaneseq
        %v273 = vshrl.u32 %v272, 7
        %v274 = vsub.s32 0, %v273
        %v275 = vrot.slane %v261, %v274
        %v278 = vlaneseq
        %v279 = vshrl.u32 %v278, 7
        %v280 = vsub.s32 0, %v279
        %v281 = vrot.slane %v207, %v280
        %v284 = vlaneseq
        %v285 = vshrl.u32 %v284, 7
        %v286 = vsub.s32 0, %v285
        %v287 = vrot.slane %v235, %v286
        %v290 = vlaneseq
        %v291 = vshrl.u32 %v290, 7
        %v292 = vsub.s32 0, %v291
        %v293 = vrot.slane %v263, %v292
        %vm295 = vcmask 1040384
        %v296 = vsel %vm295, %v205, %v269
        %vm297 = vcmask 1041408
        %v298 = vsel %vm297, %v296, %v275
        %vm299 = vcmask 1042432
        %v300 = vsel %vm299, %v298, %v281
        %vm301 = vcmask 1043456
        %v302 = vsel %vm301, %v300, %v287
        %vm303 = vcmask 1044480
        %v304 = vsel %vm303, %v302, %v293
        %v305 = vadd.f32 %v264, %v304
        %306 = vst [vmem:[#allocation5] sm:$0x3f] %v305
        // Predicated region
        $region37: #{tpu_custom_call.1} parent=27 // pred_check
          %p307 = pneg %p89
        $region38: #{tpu_custom_call.1} parent=27 // pred_check_branch
          %309 = sbr.rel (%p307) target = $region40
        $region39: #{tpu_custom_call.1} parent=27 // pred_region
          %s311 = ssub.s32 128, 128
          %312 = vsyncadd [#allocation3], %s311
          %s314 = sshll.u32 [#allocation5], 4
          %s315 = int_to_ptr.vmem [resolvable:$true] %s314
          %317 = dma.vmem_to_hbm [thread:$0]  %s315, 128, %s2, [#allocation3]
        $region40: #{tpu_custom_call.1} parent=27 // pred_fallthru
          _
        // Predicated region
        $region41: #{tpu_custom_call.1} parent=27 // pred_check
          %p318 = pneg %p89
        $region42: #{tpu_custom_call.1} parent=27 // pred_check_branch
          %320 = sbr.rel (%p318) target = $region44
        $region43: #{tpu_custom_call.1} parent=27 // pred_region
          %321 = dma.done [#allocation3], 128
        $region44: #{tpu_custom_call.1} parent=27 // pred_fallthru
          _
      $region28: #{tpu_custom_call.1} parent=5 // pred_fallthru
        _
      %p322 = scmp.le.s32.totalorder 2, %s10
      // Predicated region
      $region45: #{tpu_custom_call.1} parent=5 // pred_check
        %p323 = pneg %p322
      $region46: #{tpu_custom_call.1} parent=5 // pred_check_branch
        %325 = sbr.rel (%p323) target = $region48
      $region47: #{tpu_custom_call.1} parent=5 // pred_region
        %s326 = ssub.s32 %s10, 2
      $region48: #{tpu_custom_call.1} parent=5 // pred_fallthru
        _
    $region6: #{tpu_custom_call.1} parent=1 // loop_footer
      %s14 = sadd.s32 1, %s10
    $region7: #{tpu_custom_call.1} parent=1 // loop_footer_branch
      %9 = sbr.rel target = $region3
    $region8: #{tpu_custom_call.1} parent=1 // loop_exit
      _
    %327 = vsyncpa [#allocation3], 1
    %s328 = scalar_lea.sflag [#allocation3], 1
    %329 = vsyncpa %s328, 1
    %330 = vsyncpa [#allocation4], 1
    %s331 = scalar_lea.sflag [#allocation4], 1
    %332 = vsyncpa %s331, 1

</llo_original>
